<compile_context>
chip_gen: v6e
topology: v6e:2x2x1
jax: 0.10.0
libtpu: 0.0.40
codegen_flags: <defaults>
</compile_context>

<pallas_src>
import math
import re
from typing import Tuple

import numpy as np

import jax
import jax.numpy as jnp
from jax.experimental import pallas as pl
from jax.experimental.pallas import tpu as pltpu

_LANE = 128
_SUBLANE = 8
_MAX_COLS = 2048
_TARGET_BLOCK_BYTES = 4 * 1024 * 1024   # ~4 MiB/block; 2 arrays x 2 bufs = 16 MiB
_VMEM_LIMIT_BYTES = 48 << 20            # explicit: safe on v5e/v6e (128 MiB) & v7x (64 MiB)


def _representable_f32_bound(v: int, toward_zero: bool) -> float:
    """Nearest f32 to `v` that does not exceed it in magnitude (trace-time)."""
    b = np.float32(v)
    if toward_zero and abs(float(b)) > abs(v):
        b = np.nextafter(b, np.float32(0.0))
    return float(b)


def _transform_kernel(factor_ref, img_ref, out_ref):
    # factor_ref: SMEM f32[1]; img_ref / out_ref: (tm, cols) VMEM tiles, native dtype.
    f = factor_ref[0]
    x = img_ref[...]
    if jnp.issubdtype(out_ref.dtype, jnp.integer):
        info = jnp.iinfo(out_ref.dtype)
        lo = _representable_f32_bound(int(info.min), toward_zero=True)
        hi = _representable_f32_bound(int(info.max), toward_zero=True)
        y = x.astype(jnp.float32) * f
        # TODO(synk): abstract base class does not fix a rounding mode for integer
        # images; round-half-to-even is used here (differs from truncation on .5).
        y = jnp.clip(jnp.round(y), lo, hi)
        out_ref[...] = y.astype(out_ref.dtype)
    else:
        # Float images: multiply in native dtype (bf16 VPU on v6e/v7x; the
        # compiler extends internally on v5e).  HBM-bound either way.
        out_ref[...] = x * f.astype(out_ref.dtype)


def _launch(slab: jax.Array, factor: jax.Array) -> jax.Array:
    """Run the elementwise kernel over a lane-dense (rows, cols) slab."""
    rows, cols = slab.shape
    itemsize = jnp.dtype(slab.dtype).itemsize

    # Row tile: multiple of 8, block bytes <= ~4 MiB, and capped so the grid
    # has >= 2 steps when rows permit (lets v7x shard across both TCs).
    max_tm = max(_SUBLANE, (_TARGET_BLOCK_BYTES // (cols * itemsize)) // _SUBLANE * _SUBLANE)
    tm_half = pl.cdiv(pl.cdiv(rows, 2), _SUBLANE) * _SUBLANE
    tm = max(_SUBLANE, min(max_tm, tm_half))
    grid = (pl.cdiv(rows, tm),)

    return pl.pallas_call(
        _transform_kernel,
        out_shape=jax.ShapeDtypeStruct((rows, cols), slab.dtype),
        grid_spec=pl.GridSpec(
            grid=grid,
            in_specs=[
                pl.BlockSpec(memory_space=pltpu.MemorySpace.SMEM),  # scalar factor
                pl.BlockSpec((tm, cols), lambda i: (i, 0)),
            ],
            out_specs=pl.BlockSpec((tm, cols), lambda i: (i, 0)),
        ),
        compiler_params=pltpu.CompilerParams(
            dimension_semantics=("parallel",),
            vmem_limit_bytes=_VMEM_LIMIT_BYTES,
        ),
        cost_estimate=pl.CostEstimate(
            flops=rows * cols,
            transcendentals=0,
            bytes_accessed=2 * rows * cols * itemsize,
        ),
    )(factor, slab)


def _apply_transform_pallas(img: jax.Array, trans_factor: jax.Array) -> jax.Array:
    """Elementwise scaling of an arbitrary-shape image tensor via a tiled Pallas kernel."""
    orig_shape = img.shape
    total = math.prod(orig_shape)
    if total == 0:
        return img

    factor = jnp.asarray(trans_factor, dtype=jnp.float32).reshape((1,))

    if total % _LANE == 0:
        # Common path (e.g. C*H*W images): zero-copy reshape into a lane-dense
        # slab; cols is the largest power-of-two divisor <= _MAX_COLS that
        # keeps rows >= 8 when possible.
        cols = _LANE
        while (cols * 2 <= _MAX_COLS
               and total % (cols * 2) == 0
               and total // (cols * 2) >= _SUBLANE):
            cols *= 2
        slab = img.reshape(total // cols, cols)
        out = _launch(slab, factor)
        return out.reshape(orig_shape)

    # Rare ragged path (total not a multiple of 128): pad the flat view up to a
    # lane multiple, process, slice back.
    padded_total = pl.cdiv(total, _LANE) * _LANE
    flat = jnp.pad(img.reshape(-1), (0, padded_total - total))
    slab = flat.reshape(padded_total // _LANE, _LANE)
    out = _launch(slab, factor)
    return out.reshape(-1)[:total].reshape(orig_shape)


class ContinuousTransform:
    """JAX/Pallas port of the abstract ContinuousTransform base class.

    The abstract `transform(img, trans_factor)` is instantiated as an
    elementwise scaling transform executed in a tiled Pallas kernel.
    """

    def __init__(self, trans_range: Tuple[float, float]) -> None:
        self.trans_range: Tuple[float, float] = trans_range

    @property
    def name(self) -> str:
        name = self.__class__.__name__
        name = name.replace("Transform", "")
        return re.sub(r"([a-z])([A-Z])", r"\1 \2", name).lower()

    def transform(self, img: jax.Array, trans_factor: jax.Array) -> jax.Array:
        # TODO(synk): base-class method is abstract in PyTorch; concrete elementwise
        # scaling instantiation used here so the hot path lives in Pallas.
        return _apply_transform_pallas(img, trans_factor)

    def forward(self, img: jax.Array, key: jax.Array) -> jax.Array:
        # PyTorch uses np.random.uniform (host RNG); we use a deterministic JAX PRNG draw.
        lo, hi = self.trans_range
        trans_factor = jax.random.uniform(
            key, (), dtype=jnp.float32, minval=lo, maxval=hi
        )
        return self.transform(img, trans_factor)

    __call__ = forward


if __name__ == "__main__":
    key = jax.random.PRNGKey(0)
    k_img, k_factor, k_img2 = jax.random.split(key, 3)

    mod = ContinuousTransform(trans_range=(0.5, 1.5))
    factor_ref = jax.random.uniform(
        k_factor, (), dtype=jnp.float32, minval=0.5, maxval=1.5
    )

    # Small NCHW image batch (aligned path: total % 128 == 0, no padding copy).
    x = jax.random.normal(k_img, (2, 4, 16, 16), dtype=jnp.float32)
    out = jax.block_until_ready(mod(x, k_factor))
    assert out.shape == x.shape and out.dtype == x.dtype
    assert jnp.allclose(out, x * factor_ref, rtol=1e-6, atol=1e-6)

    # Ragged shape (total % 128 != 0) exercises the fallback pad path.
    y = jax.random.normal(k_img2, (3, 5, 7), dtype=jnp.float32)
    out_y = jax.block_until_ready(mod(y, k_factor))
    assert out_y.shape == y.shape and out_y.dtype == y.dtype
    assert jnp.allclose(out_y, y * factor_ref, rtol=1e-6, atol=1e-6)

    print("KERNEL_OK")
</pallas_src>

<mosaic_0001>
module attributes {stable_mosaic.version = 11 : i64} {
  func.func @_transform_kernel(%arg0: i32, %arg1: memref<1xf32, #tpu.memory_space<smem>>, %arg2: memref<8x256xf32, #tpu.memory_space<vmem>>, %arg3: memref<8x256xf32, #tpu.memory_space<vmem>>) attributes {dimension_semantics = [#tpu.dimension_semantics<parallel>], iteration_bounds = array<i64: 1>, scalar_prefetch = 0 : i64, scratch_operands = 0 : i64, tpu.core_type = #tpu.core_type<tc>, window_params = [{transform_indices = @transform_0, window_bounds = array<i64: 1>}, {transform_indices = @transform_1, window_bounds = array<i64: 8, 256>}, {transform_indices = @transform_2, window_bounds = array<i64: 8, 256>}]} {
    %c0 = arith.constant 0 : index
    %0 = memref.load %arg1[%c0] : memref<1xf32, #tpu.memory_space<smem>>
    %c0_0 = arith.constant 0 : index
    %c0_1 = arith.constant 0 : index
    %1 = vector.load %arg2[%c0_0, %c0_1] : memref<8x256xf32, #tpu.memory_space<vmem>>, vector<8x256xf32>
    %2 = vector.broadcast %0 : f32 to vector<8x256xf32>
    %3 = arith.mulf %1, %2 : vector<8x256xf32>
    %c0_2 = arith.constant 0 : index
    %c0_3 = arith.constant 0 : index
    %4 = vector.load %arg3[%c0_2, %c0_3] : memref<8x256xf32, #tpu.memory_space<vmem>>, vector<8x256xf32>
    tpu.vector_store %arg3[%c0_2, %c0_3], %3 {strides = array<i32>} : memref<8x256xf32, #tpu.memory_space<vmem>>, vector<8x256xf32>,
    return
  }
  func.func @transform_0(%arg0: i32) -> i32 {
    %c0_i32 = arith.constant 0 : i32
    %c0_i32_0 = arith.constant 0 : i32
    return %c0_i32 : i32
  }
  func.func @transform_1(%arg0: i32) -> (i32, i32) {
    %c0_i32 = arith.constant 0 : i32
    %c0_i32_0 = arith.constant 0 : i32
    return %arg0, %c0_i32 : i32, i32
  }
  func.func @transform_2(%arg0: i32) -> (i32, i32) {
    %c0_i32 = arith.constant 0 : i32
    %c0_i32_0 = arith.constant 0 : i32
    return %arg0, %c0_i32 : i32, i32
  }
}

</mosaic_0001>

<llo_original>
// kernel: tpu_custom_call.1
$region0: #{tpu_custom_call.1}
  #allocation0 [shape = 'u32[]', space=smem, size = 0x4, offset = 0x4, fixed_abs, tag = 'smem constant byte address 0x4 - core index']
  #allocation1 [shape = 'u32[144,128]{1,0:T(1,128)}', space=vmem, size = 0x12000, scoped, tag = 'internal scratch']
  #allocation2 [shape = 'f32[1]{0:T(128)S(6)}', space=smem, size = 0x200, scoped, tag = 'scoped memory for tpu_custom_call.1']
  %s0 = inlined_call_operand.<no memory space> [shape: f32[1], index: 0, kind: input, shape index: {}]
  %s1 = inlined_call_operand.hbm [shape: f32[8,256], index: 1, kind: input, shape index: {}]
  %s2 = inlined_call_operand.hbm [shape: f32[8,256], index: 2, kind: output, shape index: {}]
  %s3 = sld [smem:[#allocation0]]
  $region22: #{tpu_custom_call.1} parent=0
    _
  %s5 = ssub.s32 1, %s3
  %s6 = scalar_select 0, %s5, %s3
  %7 = sst [smem:[#allocation2]] %s0
  $region1: #{tpu_custom_call.1} parent=0
    #allocation3 [shape = 'u8[8192]{0}', space=vmem, size = 0x2000, scoped, tag = 'input window, operand 1, single buffered']
    #allocation4 [shape = 's32[1]{0}', space=sflag, size = 0x4, scoped, tag = 'scoped memory for tpu_custom_call.1']
    #allocation5 [shape = 's32[1]{0}', space=sflag, size = 0x4, scoped, tag = 'scoped memory for tpu_custom_call.1']
    #allocation6 [shape = 'u8[8192]{0}', space=vmem, size = 0x2000, scoped, tag = 'output window, operand 0, single buffered']
    %8 = vsyncpa [#allocation4], 0
    %9 = vsyncpa [#allocation5], 0
    // Predicated region
    $region2: #{tpu_custom_call.1} parent=1 // pred_check
      _
    $region3: #{tpu_custom_call.1} parent=1 // pred_check_branch
      %11 = sbr.rel (0) target = $region5
    $region4: #{tpu_custom_call.1} parent=1 // pred_region
      _
    $region5: #{tpu_custom_call.1} parent=1 // pred_fallthru
      _
    // Predicated region
    $region6: #{tpu_custom_call.1} parent=1 // pred_check
      _
    $region7: #{tpu_custom_call.1} parent=1 // pred_check_branch
      %13 = sbr.rel (0) target = $region9
    $region8: #{tpu_custom_call.1} parent=1 // pred_region
      %s15 = ssub.s32 256, 256
      %16 = vsyncadd [#allocation4], %s15
      %s18 = sshll.u32 [#allocation3], 4
      %s19 = int_to_ptr.vmem [resolvable:$true] %s18
      %21 = dma.hbm_to_vmem [thread:$0]  %s1, 256, %s19, [#allocation4]
    $region9: #{tpu_custom_call.1} parent=1 // pred_fallthru
      _
    // Predicated region
    $region10: #{tpu_custom_call.1} parent=1 // pred_check
      _
    $region11: #{tpu_custom_call.1} parent=1 // pred_check_branch
      %23 = sbr.rel (0) target = $region13
    $region12: #{tpu_custom_call.1} parent=1 // pred_region
      %24 = dma.done [#allocation4], 256
    $region13: #{tpu_custom_call.1} parent=1 // pred_fallthru
      _
    %s25 = sld [smem:[#allocation2]]
    %v26 = vld [vmem:[#allocation3] sm:$0xff]
    %v27 = vld [vmem:[#allocation3 + $0x8] sm:$0xff]
    %v28 = vstv %s25
    %v29 = vmul.f32 %v26, %v28
    %v30 = vmul.f32 %v27, %v28
    %31 = vst [vmem:[#allocation6] sm:$0xff] %v29
    %32 = vst [vmem:[#allocation6 + $0x8] sm:$0xff] %v30
    // Predicated region
    $region14: #{tpu_custom_call.1} parent=1 // pred_check
      _
    $region15: #{tpu_custom_call.1} parent=1 // pred_check_branch
      %34 = sbr.rel (0) target = $region17
    $region16: #{tpu_custom_call.1} parent=1 // pred_region
      %s36 = ssub.s32 256, 256
      %37 = vsyncadd [#allocation5], %s36
      %s39 = sshll.u32 [#allocation6], 4
      %s40 = int_to_ptr.vmem [resolvable:$true] %s39
      %42 = dma.vmem_to_hbm [thread:$0]  %s40, 256, %s2, [#allocation5]
    $region17: #{tpu_custom_call.1} parent=1 // pred_fallthru
      _
    // Predicated region
    $region18: #{tpu_custom_call.1} parent=1 // pred_check
      _
    $region19: #{tpu_custom_call.1} parent=1 // pred_check_branch
      %44 = sbr.rel (0) target = $region21
    $region20: #{tpu_custom_call.1} parent=1 // pred_region
      %45 = dma.done [#allocation5], 256
    $region21: #{tpu_custom_call.1} parent=1 // pred_fallthru
      _
    %46 = vsyncpa [#allocation4], 1
    %47 = vsyncpa [#allocation5], 1

</llo_original>
